<compile_context>
chip_gen: v6e
topology: v6e:2x2x1
jax: 0.10.0
libtpu: 0.0.40
codegen_flags: <defaults>
</compile_context>

<pallas_src>
import jax
import jax.numpy as jnp
from jax.experimental import pallas as pl
from jax.experimental.pallas import tpu as pltpu


def _value_mlp_kernel(x_ref, w1_ref, b1_ref, w2_ref, b2_ref, w3_ref, b3_ref,
                      o_ref):
    # (TB, D) f32 tile; cast to bf16 in-kernel (cheap VPU work hidden under the
    # DMA/MXU) so the MXU runs at bf16 rate with f32 accumulation.
    x = x_ref[...].astype(jnp.bfloat16)

    # Layer 1: Linear(state_dim, 256) + ReLU   (bf16 MXU, f32 accumulate)
    h1 = jnp.dot(x, w1_ref[...], preferred_element_type=jnp.float32)
    h1 = jnp.maximum(h1 + b1_ref[...], 0.0)                         # (TB, 256) f32

    # Layer 2: Linear(256, 128) + ReLU
    h2 = jnp.dot(h1.astype(jnp.bfloat16), w2_ref[...],
                 preferred_element_type=jnp.float32)
    h2 = jnp.maximum(h2 + b2_ref[...], 0.0)                         # (TB, 128) f32

    # Layer 3: Linear(128, 1) as VPU multiply + lane reduce (XLU) instead of an
    # N=1 matmul that would waste the MXU columns.
    out = jnp.sum(h2 * w3_ref[...], axis=-1, keepdims=True)         # (TB, 1)
    o_ref[...] = (out + b3_ref[0, 0]).astype(o_ref.dtype)


def value_model_forward(states, params, *, block_b=512):
    """Forward pass of Value_Model. states: (B, state_dim) f32 -> (B, 1) f32."""
    w1, b1, w2, b2, w3, b3 = params
    B, D = states.shape
    H1 = w1.shape[1]
    H2 = w2.shape[1]

    # Batch tile: whole batch when small, otherwise 512-row tiles.  A partial
    # last tile is handled by Pallas (masked writeback of the output block).
    TB = B if B <= block_b else block_b
    grid = (pl.cdiv(B, TB),)

    w3_row = w3.reshape(1, H2).astype(jnp.float32)   # lane-aligned row for the VPU reduce
    b3_s = b3.reshape(1, 1).astype(jnp.float32)      # scalar -> SMEM

    def resident(shape):
        # Weight/bias blocks: full array, constant index_map -> fetched once,
        # stays resident in VMEM across all batch tiles.
        return pl.BlockSpec(shape, lambda i: (0, 0))

    itemsize = lambda a: a.size * a.dtype.itemsize
    cost = pl.CostEstimate(
        flops=2 * B * (D * H1 + H1 * H2 + H2),
        transcendentals=0,
        bytes_accessed=(itemsize(states) + itemsize(w1) + itemsize(w2)
                        + (H2 + H1 + H2 + 1) * 4 + B * 4),
    )

    return pl.pallas_call(
        _value_mlp_kernel,
        out_shape=jax.ShapeDtypeStruct((B, 1), jnp.float32),
        grid=grid,
        in_specs=[
            pl.BlockSpec((TB, D), lambda i: (i, 0)),                # states (streamed)
            resident((D, H1)),                                      # w1 (bf16)
            resident((1, H1)),                                      # b1 (f32)
            resident((H1, H2)),                                     # w2 (bf16)
            resident((1, H2)),                                      # b2 (f32)
            resident((1, H2)),                                      # w3 row (f32)
            pl.BlockSpec(memory_space=pltpu.MemorySpace.SMEM),      # b3 scalar
        ],
        out_specs=pl.BlockSpec((TB, 1), lambda i: (i, 0)),
        compiler_params=pltpu.CompilerParams(
            dimension_semantics=("parallel",),   # batch tiles are independent (v7x megacore)
            vmem_limit_bytes=32 * 1024 * 1024,
        ),
        cost_estimate=cost,
    )(states, w1, b1, w2, b2, w3_row, b3_s)


def init_params(key, state_dim):
    """Deterministic init mimicking PyTorch nn.Linear defaults (uniform
    +/- 1/sqrt(fan_in)).  Weights stored as (in, out); w1/w2 kept in bf16 for
    the MXU, biases and w3 in f32."""
    dims = [(state_dim, 256), (256, 128), (128, 1)]
    params = []
    for li, (fan_in, fan_out) in enumerate(dims):
        key, kw, kb = jax.random.split(key, 3)
        bound = 1.0 / jnp.sqrt(jnp.float32(fan_in))
        w = jax.random.uniform(kw, (fan_in, fan_out), jnp.float32,
                               minval=-bound, maxval=bound)
        b = jax.random.uniform(kb, (1, fan_out), jnp.float32,
                               minval=-bound, maxval=bound)
        if li < 2:  # the two MXU layers use bf16 weights
            w = w.astype(jnp.bfloat16)
        params += [w, b]
    return tuple(params)


def _reference_forward(states, params):
    """Pure-JAX reference that mimics the kernel's bf16-input / f32-accumulate
    matmul precision."""
    w1, b1, w2, b2, w3, b3 = params
    h1 = jnp.dot(states.astype(jnp.bfloat16), w1,
                 preferred_element_type=jnp.float32)
    h1 = jnp.maximum(h1 + b1, 0.0)
    h2 = jnp.dot(h1.astype(jnp.bfloat16), w2,
                 preferred_element_type=jnp.float32)
    h2 = jnp.maximum(h2 + b2, 0.0)
    return jnp.dot(h2, w3, preferred_element_type=jnp.float32) + b3


if __name__ == "__main__":
    key = jax.random.PRNGKey(0)
    k_x, k_p = jax.random.split(key)

    batch = 8
    state_dim = 32
    states = jax.random.normal(k_x, (batch, state_dim), jnp.float32)
    params = init_params(k_p, state_dim)

    out = value_model_forward(states, params)
    out = jax.block_until_ready(out)

    ref = _reference_forward(states, params)
    assert out.shape == (batch, 1), out.shape
    assert jnp.allclose(out, ref, atol=1e-3, rtol=1e-3), "mismatch vs reference"

    print("KERNEL_OK")
</pallas_src>

<mosaic_0001>
module attributes {stable_mosaic.version = 11 : i64} {
  func.func @_value_mlp_kernel(%arg0: i32, %arg1: memref<8x32xf32, #tpu.memory_space<vmem>>, %arg2: memref<32x256xbf16, #tpu.memory_space<vmem>>, %arg3: memref<1x256xf32, #tpu.memory_space<vmem>>, %arg4: memref<256x128xbf16, #tpu.memory_space<vmem>>, %arg5: memref<1x128xf32, #tpu.memory_space<vmem>>, %arg6: memref<1x128xf32, #tpu.memory_space<vmem>>, %arg7: memref<1x1xf32, #tpu.memory_space<smem>>, %arg8: memref<8x1xf32, #tpu.memory_space<vmem>>) attributes {dimension_semantics = [#tpu.dimension_semantics<parallel>], iteration_bounds = array<i64: 1>, scalar_prefetch = 0 : i64, scratch_operands = 0 : i64, tpu.core_type = #tpu.core_type<tc>, window_params = [{transform_indices = @transform_0, window_bounds = array<i64: 8, 32>}, {pipeline_mode = #tpu.pipeline_mode<synchronous>, transform_indices = @transform_1, window_bounds = array<i64: 32, 256>}, {pipeline_mode = #tpu.pipeline_mode<synchronous>, transform_indices = @transform_2, window_bounds = array<i64: 1, 256>}, {pipeline_mode = #tpu.pipeline_mode<synchronous>, transform_indices = @transform_3, window_bounds = array<i64: 256, 128>}, {pipeline_mode = #tpu.pipeline_mode<synchronous>, transform_indices = @transform_4, window_bounds = array<i64: 1, 128>}, {pipeline_mode = #tpu.pipeline_mode<synchronous>, transform_indices = @transform_5, window_bounds = array<i64: 1, 128>}, {transform_indices = @transform_6, window_bounds = array<i64: 1, 1>}, {transform_indices = @transform_7, window_bounds = array<i64: 8, 1>}]} {
    %c0 = arith.constant 0 : index
    %c0_0 = arith.constant 0 : index
    %0 = vector.load %arg1[%c0, %c0_0] : memref<8x32xf32, #tpu.memory_space<vmem>>, vector<8x32xf32>
    %1 = arith.truncf %0 : vector<8x32xf32> to vector<8x32xbf16>
    %c0_1 = arith.constant 0 : index
    %c0_2 = arith.constant 0 : index
    %2 = vector.load %arg2[%c0_1, %c0_2] : memref<32x256xbf16, #tpu.memory_space<vmem>>, vector<32x256xbf16>
    %cst = arith.constant dense<0.000000e+00> : vector<8x256xf32>
    %3 = tpu.matmul %1, %2, %cst {dimension_numbers = #tpu.dot_dimension_numbers<[1], [0], [0], [1], [0, 0, 1, 1], [], []>} : vector<8x32xbf16>, vector<32x256xbf16>, vector<8x256xf32> -> vector<8x256xf32>
    %c0_3 = arith.constant 0 : index
    %c0_4 = arith.constant 0 : index
    %4 = vector.load %arg3[%c0_3, %c0_4] : memref<1x256xf32, #tpu.memory_space<vmem>>, vector<1x256xf32>
    %5 = vector.broadcast %4 : vector<1x256xf32> to vector<8x256xf32>
    %6 = arith.addf %3, %5 : vector<8x256xf32>
    %cst_5 = arith.constant 0.000000e+00 : f32
    %7 = vector.broadcast %cst_5 : f32 to vector<8x256xf32>
    %8 = arith.maximumf %6, %7 : vector<8x256xf32>
    %9 = arith.truncf %8 : vector<8x256xf32> to vector<8x256xbf16>
    %c0_6 = arith.constant 0 : index
    %c0_7 = arith.constant 0 : index
    %10 = vector.load %arg4[%c0_6, %c0_7] : memref<256x128xbf16, #tpu.memory_space<vmem>>, vector<256x128xbf16>
    %cst_8 = arith.constant dense<0.000000e+00> : vector<8x128xf32>
    %11 = tpu.matmul %9, %10, %cst_8 {dimension_numbers = #tpu.dot_dimension_numbers<[1], [0], [0], [1], [0, 0, 1, 1], [], []>} : vector<8x256xbf16>, vector<256x128xbf16>, vector<8x128xf32> -> vector<8x128xf32>
    %c0_9 = arith.constant 0 : index
    %c0_10 = arith.constant 0 : index
    %12 = vector.load %arg5[%c0_9, %c0_10] : memref<1x128xf32, #tpu.memory_space<vmem>>, vector<1x128xf32>
    %13 = vector.broadcast %12 : vector<1x128xf32> to vector<8x128xf32>
    %14 = arith.addf %11, %13 : vector<8x128xf32>
    %cst_11 = arith.constant 0.000000e+00 : f32
    %15 = vector.broadcast %cst_11 : f32 to vector<8x128xf32>
    %16 = arith.maximumf %14, %15 : vector<8x128xf32>
    %c0_12 = arith.constant 0 : index
    %c0_13 = arith.constant 0 : index
    %17 = vector.load %arg6[%c0_12, %c0_13] : memref<1x128xf32, #tpu.memory_space<vmem>>, vector<1x128xf32>
    %18 = vector.broadcast %17 : vector<1x128xf32> to vector<8x128xf32>
    %19 = arith.mulf %16, %18 : vector<8x128xf32>
    %cst_14 = arith.constant dense<0.000000e+00> : vector<8xf32>
    %20 = vector.multi_reduction <add>, %19, %cst_14 [1] : vector<8x128xf32> to vector<8xf32>
    %21 = vector.shape_cast %20 : vector<8xf32> to vector<8x1xf32>
    %c0_15 = arith.constant 0 : index
    %c0_16 = arith.constant 0 : index
    %22 = memref.load %arg7[%c0_15, %c0_16] : memref<1x1xf32, #tpu.memory_space<smem>>
    %23 = vector.broadcast %22 : f32 to vector<8x1xf32>
    %24 = arith.addf %21, %23 : vector<8x1xf32>
    %c0_17 = arith.constant 0 : index
    %c0_18 = arith.constant 0 : index
    %25 = vector.load %arg8[%c0_17, %c0_18] : memref<8x1xf32, #tpu.memory_space<vmem>>, vector<8x1xf32>
    tpu.vector_store %arg8[%c0_17, %c0_18], %24 {strides = array<i32>} : memref<8x1xf32, #tpu.memory_space<vmem>>, vector<8x1xf32>,
    return
  }
  func.func @transform_0(%arg0: i32) -> (i32, i32) {
    %c0_i32 = arith.constant 0 : i32
    %c0_i32_0 = arith.constant 0 : i32
    return %arg0, %c0_i32 : i32, i32
  }
  func.func @transform_1(%arg0: i32) -> (i32, i32) {
    %c0_i32 = arith.constant 0 : i32
    %c0_i32_0 = arith.constant 0 : i32
    %c0_i32_1 = arith.constant 0 : i32
    return %c0_i32, %c0_i32_0 : i32, i32
  }
  func.func @transform_2(%arg0: i32) -> (i32, i32) {
    %c0_i32 = arith.constant 0 : i32
    %c0_i32_0 = arith.constant 0 : i32
    %c0_i32_1 = arith.constant 0 : i32
    return %c0_i32, %c0_i32_0 : i32, i32
  }
  func.func @transform_3(%arg0: i32) -> (i32, i32) {
    %c0_i32 = arith.constant 0 : i32
    %c0_i32_0 = arith.constant 0 : i32
    %c0_i32_1 = arith.constant 0 : i32
    return %c0_i32, %c0_i32_0 : i32, i32
  }
  func.func @transform_4(%arg0: i32) -> (i32, i32) {
    %c0_i32 = arith.constant 0 : i32
    %c0_i32_0 = arith.constant 0 : i32
    %c0_i32_1 = arith.constant 0 : i32
    return %c0_i32, %c0_i32_0 : i32, i32
  }
  func.func @transform_5(%arg0: i32) -> (i32, i32) {
    %c0_i32 = arith.constant 0 : i32
    %c0_i32_0 = arith.constant 0 : i32
    %c0_i32_1 = arith.constant 0 : i32
    return %c0_i32, %c0_i32_0 : i32, i32
  }
  func.func @transform_6(%arg0: i32) -> (i32, i32) {
    %c0_i32 = arith.constant 0 : i32
    %c0_i32_0 = arith.constant 0 : i32
    %c0_i32_1 = arith.constant 0 : i32
    return %c0_i32, %c0_i32_0 : i32, i32
  }
  func.func @transform_7(%arg0: i32) -> (i32, i32) {
    %c0_i32 = arith.constant 0 : i32
    %c0_i32_0 = arith.constant 0 : i32
    return %arg0, %c0_i32 : i32, i32
  }
}

</mosaic_0001>

<llo_original>
// kernel: tpu_custom_call.1
$region0: #{tpu_custom_call.1}
  #allocation0 [shape = 'u32[]', space=smem, size = 0x4, offset = 0x4, fixed_abs, tag = 'smem constant byte address 0x4 - core index']
  #allocation1 [shape = 'u32[144,128]{1,0:T(1,128)}', space=vmem, size = 0x12000, scoped, tag = 'internal scratch']
  #allocation2 [shape = 'f32[1,1]{1,0:T(1,128)S(6)}', space=smem, size = 0x200, scoped, tag = 'scoped memory for tpu_custom_call.1']
  %s0 = inlined_call_operand.hbm [shape: f32[8,32], index: 0, kind: input, shape index: {}]
  %s1 = inlined_call_operand.hbm [shape: bf16[32,256], index: 1, kind: input, shape index: {}]
  %s2 = inlined_call_operand.vmem [shape: f32[1,256], index: 2, kind: input, shape index: {}]
  %s3 = inlined_call_operand.hbm [shape: bf16[256,128], index: 3, kind: input, shape index: {}]
  %s4 = inlined_call_operand.vmem [shape: f32[1,128], index: 4, kind: input, shape index: {}]
  %s5 = inlined_call_operand.vmem [shape: f32[1,128], index: 5, kind: input, shape index: {}]
  %s6 = inlined_call_operand.<no memory space> [shape: f32[1,1], index: 6, kind: input, shape index: {}]
  %s7 = inlined_call_operand.vmem [shape: f32[8,1], index: 7, kind: output, shape index: {}]
  %s8 = sld [smem:[#allocation0]]
  $region50: #{tpu_custom_call.1} parent=0
    _
  %s10 = ssub.s32 1, %s8
  %s11 = scalar_select 0, %s10, %s8
  %12 = sst [smem:[#allocation2]] %s6
  $region1: #{tpu_custom_call.1} parent=0
    #allocation3 [shape = 'u8[4096]{0}', space=vmem, size = 0x1000, scoped, tag = 'input window, operand 0, single buffered']
    #allocation4 [shape = 's32[1]{0}', space=sflag, size = 0x4, scoped, tag = 'scoped memory for tpu_custom_call.1']
    #allocation5 [shape = 'u8[16384]{0}', space=vmem, size = 0x4000, scoped, tag = 'input window, operand 1, single buffered']
    #allocation6 [shape = 's32[1]{0}', space=sflag, size = 0x4, scoped, tag = 'scoped memory for tpu_custom_call.1']
    #allocation7 [shape = 'u8[65536]{0}', space=vmem, size = 0x10000, scoped, tag = 'input window, operand 3, single buffered']
    %13 = vsyncpa [#allocation4], 0
    %14 = vsyncpa [#allocation6], 0
    // Predicated region
    $region2: #{tpu_custom_call.1} parent=1 // pred_check
      _
    $region3: #{tpu_custom_call.1} parent=1 // pred_check_branch
      %16 = sbr.rel (0) target = $region5
    $region4: #{tpu_custom_call.1} parent=1 // pred_region
      %s18 = ssub.s32 128, 128
      %19 = vsyncadd [#allocation4], %s18
      %s21 = sshll.u32 [#allocation3], 4
      %s22 = int_to_ptr.vmem [resolvable:$true] %s21
      %24 = dma.hbm_to_vmem [thread:$0]  %s0, 128, %s22, [#allocation4]
    $region5: #{tpu_custom_call.1} parent=1 // pred_fallthru
      _
    // Predicated region
    $region6: #{tpu_custom_call.1} parent=1 // pred_check
      _
    $region7: #{tpu_custom_call.1} parent=1 // pred_check_branch
      %26 = sbr.rel (0) target = $region9
    $region8: #{tpu_custom_call.1} parent=1 // pred_region
      %s28 = ssub.s32 512, 512
      %29 = vsyncadd [#allocation6], %s28
      %s30 = sshll.u32 [#allocation5], 4
      %s31 = int_to_ptr.vmem [resolvable:$true] %s30
      %36 = dma.hbm_to_vmem [thread:$0]  %s1, 512, %s31, [#allocation6], 128, 128, 8
    $region9: #{tpu_custom_call.1} parent=1 // pred_fallthru
      _
    // Predicated region
    $region10: #{tpu_custom_call.1} parent=1 // pred_check
      _
    $region11: #{tpu_custom_call.1} parent=1 // pred_check_branch
      %38 = sbr.rel (0) target = $region13
    $region12: #{tpu_custom_call.1} parent=1 // pred_region
      _
    $region13: #{tpu_custom_call.1} parent=1 // pred_fallthru
      _
    // Predicated region
    $region14: #{tpu_custom_call.1} parent=1 // pred_check
      _
    $region15: #{tpu_custom_call.1} parent=1 // pred_check_branch
      %40 = sbr.rel (0) target = $region17
    $region16: #{tpu_custom_call.1} parent=1 // pred_region
      %s42 = ssub.s32 2048, 2048
      %43 = vsyncadd [#allocation6], %s42
      %s44 = sshll.u32 [#allocation7], 4
      %s45 = int_to_ptr.vmem [resolvable:$true] %s44
      %50 = dma.hbm_to_vmem [thread:$0]  %s3, 2048, %s45, [#allocation6], 64, 64, 4
    $region17: #{tpu_custom_call.1} parent=1 // pred_fallthru
      _
    // Predicated region
    $region18: #{tpu_custom_call.1} parent=1 // pred_check
      _
    $region19: #{tpu_custom_call.1} parent=1 // pred_check_branch
      %52 = sbr.rel (0) target = $region21
    $region20: #{tpu_custom_call.1} parent=1 // pred_region
      _
    $region21: #{tpu_custom_call.1} parent=1 // pred_fallthru
      _
    // Predicated region
    $region22: #{tpu_custom_call.1} parent=1 // pred_check
      _
    $region23: #{tpu_custom_call.1} parent=1 // pred_check_branch
      %54 = sbr.rel (0) target = $region25
    $region24: #{tpu_custom_call.1} parent=1 // pred_region
      _
    $region25: #{tpu_custom_call.1} parent=1 // pred_fallthru
      _
    // Predicated region
    $region26: #{tpu_custom_call.1} parent=1 // pred_check
      _
    $region27: #{tpu_custom_call.1} parent=1 // pred_check_branch
      %56 = sbr.rel (0) target = $region29
    $region28: #{tpu_custom_call.1} parent=1 // pred_region
      _
    $region29: #{tpu_custom_call.1} parent=1 // pred_fallthru
      _
    // Predicated region
    $region30: #{tpu_custom_call.1} parent=1 // pred_check
      _
    $region31: #{tpu_custom_call.1} parent=1 // pred_check_branch
      %58 = sbr.rel (0) target = $region33
    $region32: #{tpu_custom_call.1} parent=1 // pred_region
      %59 = dma.done [#allocation4], 128
    $region33: #{tpu_custom_call.1} parent=1 // pred_fallthru
      _
    // Predicated region
    $region34: #{tpu_custom_call.1} parent=1 // pred_check
      _
    $region35: #{tpu_custom_call.1} parent=1 // pred_check_branch
      %61 = sbr.rel (0) target = $region37
    $region36: #{tpu_custom_call.1} parent=1 // pred_region
      %62 = dma.done [#allocation6], 512
    $region37: #{tpu_custom_call.1} parent=1 // pred_fallthru
      _
    // Predicated region
    $region38: #{tpu_custom_call.1} parent=1 // pred_check
      _
    $region39: #{tpu_custom_call.1} parent=1 // pred_check_branch
      %64 = sbr.rel (0) target = $region41
    $region40: #{tpu_custom_call.1} parent=1 // pred_region
      %65 = dma.done [#allocation6], 2048
    $region41: #{tpu_custom_call.1} parent=1 // pred_fallthru
      _
    %v67 = vld [vmem:[#allocation3] sm:$0xff]
    %v68 = vpack.c.bf16 %v67, %v67
    %v69 = vld [vmem:[#allocation5] sm:$0xff]
    %v70 = vld [vmem:[#allocation5 + $0x8] sm:$0xff]
    %v71 = vld [vmem:[#allocation5 + $0x10] sm:$0xff]
    %v72 = vld [vmem:[#allocation5 + $0x18] sm:$0xff]
    %v73 = vld [vmem:[%s2] sm:$0x3]
    %v75 = vlaneseq
    %v76 = vshrl.u32 %v75, 7
    %v77 = vsub.s32 0, %v76
    %v78 = vrot.slane %v73, %v77
    %v79 = vlaneseq
    %v80 = vshrl.u32 %v79, 7
    %v81 = vsub.s32 1, %v80
    %v82 = vrot.slane %v73, %v81
    %v89 = vunpack.c.l.b16 %v69
    %v90 = vunpack.c.h.b16 %v69
    %v91 = vunpack.c.l.b16 %v70
    %v92 = vunpack.c.h.b16 %v70
    %v93 = vunpack.c.l.b16 %v71
    %v94 = vunpack.c.h.b16 %v71
    %v95 = vunpack.c.l.b16 %v72
    %v96 = vunpack.c.h.b16 %v72
    %v97 = vpack.c.b16 %v91, %v89
    %v98 = vpack.c.b16 %v92, %v90
    %v99 = vpack.c.b16 %v95, %v93
    %v100 = vpack.c.b16 %v96, %v94
    %vm105 = vcmask 261120
    %v107 = vsel %vm105, %v68, 0
    %109 = vmatprep.subr.bf16.mxu0 0
    %110 = vmatpush1.bf16.msra.mxu0 0
    %111 = vmatprep.subr.bf16.mxu0 0
    %112 = vmatpush1.bf16.msra.mxu0 0
    %113 = vmatprep.subr.bf16.mxu0 0
    %114 = vmatpush1.bf16.msra.mxu0 0
    %115 = vmatprep.subr.bf16.mxu0 0
    %116 = vmatpush1.bf16.msra.mxu0 0
    %117 = vmatprep.subr.bf16.mxu0 0
    %118 = vmatpush1.bf16.msra.mxu0 0
    %119 = vmatprep.subr.bf16.mxu0 0
    %120 = vmatpush1.bf16.msra.mxu0 0
    %121 = vmatprep.subr.bf16.mxu0 %v100
    %122 = vmatpush1.bf16.msra.mxu0 %v99
    %123 = vmatprep.subr.bf16.mxu0 %v98
    %124 = vmatpush1.bf16.msra.mxu0 %v97
    %125 = vmatprep.subr.bf16.mxu0 0
    %126 = vmatpush2.bf16.msra.mxu0 0
    %127 = vmatprep.subr.bf16.mxu0 0
    %128 = vmatpush2.bf16.msra.mxu0 0
    %129 = vmatprep.subr.bf16.mxu0 0
    %130 = vmatpush2.bf16.msra.mxu0 0
    %131 = vmatprep.subr.bf16.mxu0 0
    %132 = vmatpush2.bf16.msra.mxu0 0
    %133 = vmatprep.subr.bf16.mxu0 0
    %134 = vmatpush2.bf16.msra.mxu0 0
    %135 = vmatprep.subr.bf16.mxu0 0
    %136 = vmatpush2.bf16.msra.mxu0 0
    %137 = vmatprep.subr.bf16.mxu0 0
    %138 = vmatpush2.bf16.msra.mxu0 0
    %139 = vmatprep.subr.bf16.mxu0 0
    %140 = vmatpush2.bf16.msra.mxu0 0
    %141 = vmatprep.mubr.bf16.mxu0 0
    %142 = vmatmul.mubr.bf16.gmra.mxu0 %v107
    %v143 = vpop.f32.mrf.mxu0
    %v144 = vadd.f32 %v78, %v143
    %v145 = vpop.f32.mrf.mxu0
    %v146 = vadd.f32 %v82, %v145
    %v147 = vpop.f32.mrf.mxu0
    %v148 = vpop.f32.mrf.mxu0
    %149 = vdwg.mxu0
    %v150 = vmax.f32 %v144, 0.0
    %v151 = vmax.f32 %v146, 0.0
    %v152 = vpack.c.bf16 %v150, %v150
    %v153 = vpack.c.bf16 %v151, %v151
    %v154 = vld [vmem:[#allocation7] sm:$0xf]
    %v155 = vld [vmem:[#allocation7 + $0x4] sm:$0xf]
    %v156 = vld [vmem:[#allocation7 + $0x8] sm:$0xf]
    %v157 = vld [vmem:[#allocation7 + $0xc] sm:$0xf]
    %v158 = vld [vmem:[#allocation7 + $0x10] sm:$0xf]
    %v159 = vld [vmem:[#allocation7 + $0x14] sm:$0xf]
    %v160 = vld [vmem:[#allocation7 + $0x18] sm:$0xf]
    %v161 = vld [vmem:[#allocation7 + $0x1c] sm:$0xf]
    %v162 = vld [vmem:[#allocation7 + $0x20] sm:$0xf]
    %v163 = vld [vmem:[#allocation7 + $0x24] sm:$0xf]
    %v164 = vld [vmem:[#allocation7 + $0x28] sm:$0xf]
    %v165 = vld [vmem:[#allocation7 + $0x2c] sm:$0xf]
    %v166 = vld [vmem:[#allocation7 + $0x30] sm:$0xf]
    %v167 = vld [vmem:[#allocation7 + $0x34] sm:$0xf]
    %v168 = vld [vmem:[#allocation7 + $0x38] sm:$0xf]
    %v169 = vld [vmem:[#allocation7 + $0x3c] sm:$0xf]
    %v170 = vld [vmem:[#allocation7 + $0x40] sm:$0xf]
    %v171 = vld [vmem:[#allocation7 + $0x44] sm:$0xf]
    %v172 = vld [vmem:[#allocation7 + $0x48] sm:$0xf]
    %v173 = vld [vmem:[#allocation7 + $0x4c] sm:$0xf]
    %v174 = vld [vmem:[#allocation7 + $0x50] sm:$0xf]
    %v175 = vld [vmem:[#allocation7 + $0x54] sm:$0xf]
    %v176 = vld [vmem:[#allocation7 + $0x58] sm:$0xf]
    %v177 = vld [vmem:[#allocation7 + $0x5c] sm:$0xf]
    %v178 = vld [vmem:[#allocation7 + $0x60] sm:$0xf]
    %v179 = vld [vmem:[#allocation7 + $0x64] sm:$0xf]
    %v180 = vld [vmem:[#allocation7 + $0x68] sm:$0xf]
    %v181 = vld [vmem:[#allocation7 + $0x6c] sm:$0xf]
    %v182 = vld [vmem:[#allocation7 + $0x70] sm:$0xf]
    %v183 = vld [vmem:[#allocation7 + $0x74] sm:$0xf]
    %v184 = vld [vmem:[#allocation7 + $0x78] sm:$0xf]
    %v185 = vld [vmem:[#allocation7 + $0x7c] sm:$0xf]
    %v186 = vld [vmem:[%s4] sm:$0x1]
    %v188 = vlaneseq
    %v189 = vshrl.u32 %v188, 7
    %v190 = vsub.s32 0, %v189
    %v191 = vrot.slane %v186, %v190
    %v225 = vunpack.c.l.b16 %v154
    %v226 = vunpack.c.l.b16 %v155
    %v227 = vunpack.c.l.b16 %v156
    %v228 = vunpack.c.l.b16 %v157
    %v229 = vunpack.c.l.b16 %v158
    %v230 = vunpack.c.l.b16 %v159
    %v231 = vunpack.c.l.b16 %v160
    %v232 = vunpack.c.l.b16 %v161
    %v233 = vunpack.c.l.b16 %v162
    %v234 = vunpack.c.l.b16 %v163
    %v235 = vunpack.c.l.b16 %v164
    %v236 = vunpack.c.l.b16 %v165
    %v237 = vunpack.c.l.b16 %v166
    %v238 = vunpack.c.l.b16 %v167
    %v239 = vunpack.c.l.b16 %v168
    %v240 = vunpack.c.l.b16 %v169
    %v241 = vunpack.c.l.b16 %v170
    %v242 = vunpack.c.l.b16 %v171
    %v243 = vunpack.c.l.b16 %v172
    %v244 = vunpack.c.l.b16 %v173
    %v245 = vunpack.c.l.b16 %v174
    %v246 = vunpack.c.l.b16 %v175
    %v247 = vunpack.c.l.b16 %v176
    %v248 = vunpack.c.l.b16 %v177
    %v249 = vunpack.c.l.b16 %v178
    %v250 = vunpack.c.l.b16 %v179
    %v251 = vunpack.c.l.b16 %v180
    %v252 = vunpack.c.l.b16 %v181
    %v253 = vunpack.c.l.b16 %v182
    %v254 = vunpack.c.l.b16 %v183
    %v255 = vunpack.c.l.b16 %v184
    %v256 = vunpack.c.l.b16 %v185
    %v257 = vpack.c.b16 %v226, %v225
    %v258 = vpack.c.b16 %v228, %v227
    %v259 = vpack.c.b16 %v230, %v229
    %v260 = vpack.c.b16 %v232, %v231
    %v261 = vpack.c.b16 %v234, %v233
    %v262 = vpack.c.b16 %v236, %v235
    %v263 = vpack.c.b16 %v238, %v237
    %v264 = vpack.c.b16 %v240, %v239
    %v265 = vpack.c.b16 %v242, %v241
    %v266 = vpack.c.b16 %v244, %v243
    %v267 = vpack.c.b16 %v246, %v245
    %v268 = vpack.c.b16 %v248, %v247
    %v269 = vpack.c.b16 %v250, %v249
    %v270 = vpack.c.b16 %v252, %v251
    %v271 = vpack.c.b16 %v254, %v253
    %v272 = vpack.c.b16 %v256, %v255
    %289 = vmatprep.subr.bf16.mxu0 0
    %290 = vmatpush1.bf16.msra.mxu0 %v264
    %291 = vmatprep.subr.bf16.mxu0 0
    %292 = vmatpush1.bf16.msra.mxu0 %v263
    %293 = vmatprep.subr.bf16.mxu0 0
    %294 = vmatpush1.bf16.msra.mxu0 %v262
    %295 = vmatprep.subr.bf16.mxu0 0
    %296 = vmatpush1.bf16.msra.mxu0 %v261
    %297 = vmatprep.subr.bf16.mxu0 0
    %298 = vmatpush1.bf16.msra.mxu0 %v260
    %299 = vmatprep.subr.bf16.mxu0 0
    %300 = vmatpush1.bf16.msra.mxu0 %v259
    %301 = vmatprep.subr.bf16.mxu0 0
    %302 = vmatpush1.bf16.msra.mxu0 %v258
    %303 = vmatprep.subr.bf16.mxu0 0
    %304 = vmatpush1.bf16.msra.mxu0 %v257
    %305 = vmatprep.subr.bf16.mxu0 0
    %306 = vmatpush2.bf16.msra.mxu0 %v272
    %307 = vmatprep.subr.bf16.mxu0 0
    %308 = vmatpush2.bf16.msra.mxu0 %v271
    %309 = vmatprep.subr.bf16.mxu0 0
    %310 = vmatpush2.bf16.msra.mxu0 %v270
    %311 = vmatprep.subr.bf16.mxu0 0
    %312 = vmatpush2.bf16.msra.mxu0 %v269
    %313 = vmatprep.subr.bf16.mxu0 0
    %314 = vmatpush2.bf16.msra.mxu0 %v268
    %315 = vmatprep.subr.bf16.mxu0 0
    %316 = vmatpush2.bf16.msra.mxu0 %v267
    %317 = vmatprep.subr.bf16.mxu0 0
    %318 = vmatpush2.bf16.msra.mxu0 %v266
    %319 = vmatprep.subr.bf16.mxu0 0
    %320 = vmatpush2.bf16.msra.mxu0 %v265
    %321 = vmatprep.mubr.bf16.mxu0 %v153
    %322 = vmatmul.mubr.bf16.gmra.mxu0 %v152
    %v323 = vpop.f32.mrf.mxu0
    %v324 = vadd.f32 %v191, %v323
    %v325 = vpop.f32.mrf.mxu0
    %v326 = vpop.f32.mrf.mxu0
    %v327 = vpop.f32.mrf.mxu0
    %328 = vdwg.mxu0
    %v329 = vmax.f32 %v324, 0.0
    %v330 = vld [vmem:[%s5] sm:$0x1]
    %v332 = vlaneseq
    %v333 = vshrl.u32 %v332, 7
    %v334 = vsub.s32 0, %v333
    %v335 = vrot.slane %v330, %v334
    %v337 = vmul.f32 %v329, %v335
    %338 = vadd.xlane.f32.xlu0 %v337
    %v339 = vpop.xlane.xlu0 %338
    %s340 = sld [smem:[#allocation2]]
    %v341 = vstv %s340
    %v342 = vadd.f32 %v339, %v341
    %vm343 = vcmask 7168
    %344 = vst.msk [vmem:[%s7] sm:$0xff] %vm343, %v342
    // Predicated region
    $region42: #{tpu_custom_call.1} parent=1 // pred_check
      _
    $region43: #{tpu_custom_call.1} parent=1 // pred_check_branch
      %346 = sbr.rel (0) target = $region45
    $region44: #{tpu_custom_call.1} parent=1 // pred_region
      _
    $region45: #{tpu_custom_call.1} parent=1 // pred_fallthru
      _
    // Predicated region
    $region46: #{tpu_custom_call.1} parent=1 // pred_check
      _
    $region47: #{tpu_custom_call.1} parent=1 // pred_check_branch
      %348 = sbr.rel (0) target = $region49
    $region48: #{tpu_custom_call.1} parent=1 // pred_region
      _
    $region49: #{tpu_custom_call.1} parent=1 // pred_fallthru
      _
    %349 = vsyncpa [#allocation4], 1
    %350 = vsyncpa [#allocation6], 1

</llo_original>
